<compile_context>
chip_gen: v7x
topology: tpu7x:2x2x1
jax: 0.10.0
libtpu: 0.0.40
codegen_flags: <defaults>
</compile_context>

<pallas_src>
import functools
import math

import jax
import jax.numpy as jnp
from jax.experimental import pallas as pl
from jax.experimental.pallas import tpu as pltpu

NEG_SLOPE = 0.1  # matches nn.LeakyReLU(negative_slope=0.1) in the PyTorch spec
LANE = 128


def _leaky_relu(x, negative_slope=NEG_SLOPE):
    return jnp.where(x >= 0, x, negative_slope * x)


def _round_up(n, m):
    return ((n + m - 1) // m) * m


def mlp_kernel(x_ref, w1_ref, b1_ref, w2_ref, b2_ref, w3_ref, b3_ref, o_ref):
    # Cast x to the matmul dtype inside the kernel: the f32 tile is DMA'd as-is
    # and the cast runs on the VPU (plenty of slack under the DMA) — no extra
    # wrapper-side HBM read/write pass over x.
    x = x_ref[...].astype(w1_ref.dtype)

    # layer 1: Linear(n_input -> H) + LeakyReLU(0.1); f32 accumulation on MXU.
    h1 = jnp.dot(x, w1_ref[...], preferred_element_type=jnp.float32)
    h1 = _leaky_relu(h1 + b1_ref[...])           # bias [1,H] broadcasts over rows

    # layer 2: Linear(H -> H) + LeakyReLU(0.1)
    h2 = jnp.dot(h1.astype(w2_ref.dtype), w2_ref[...],
                 preferred_element_type=jnp.float32)
    h2 = _leaky_relu(h2 + b2_ref[...])

    # layer 3: Linear(H -> n_output), no activation.
    out = jnp.dot(h2.astype(w3_ref.dtype), w3_ref[...],
                  preferred_element_type=jnp.float32)
    o_ref[...] = (out + b3_ref[...]).astype(o_ref.dtype)


def prepare_params(params, matmul_dtype=jnp.bfloat16):
    """One-time parameter prep, hoisted out of the per-call forward.

    Weights -> matmul_dtype (bf16 default: halves weight DMA bytes and hits the
    native bf16 MXU path on v5e/v6e/v7x).  Biases stay f32 so the bias add and
    LeakyReLU run in f32 (v5e's VPU has no bf16 path).
    """
    return {
        "w1": params["w1"].astype(matmul_dtype),
        "w2": params["w2"].astype(matmul_dtype),
        "w3": params["w3"].astype(matmul_dtype),
        "b1": params["b1"].astype(jnp.float32),
        "b2": params["b2"].astype(jnp.float32),
        "b3": params["b3"].astype(jnp.float32),
    }


def _pick_tile(B):
    """Batch tile: big (<=1024) to amortize per-grid-step overhead, but clamped
    so the grid has >=2 steps when B allows it (v7x has 2 TensorCores and the
    'parallel' batch axis is how work shards across them).  Multiple of 128."""
    tb = min(1024, _round_up(max(B, 1), LANE))
    tb = min(tb, max(LANE, _round_up(-(-max(B, 1) // 2), LANE)))
    return tb


@functools.partial(jax.jit, static_argnames=("tb",))
def nonlinear_regressor(x, params, *, tb=None):
    """Forward pass of NonLinearRegressor.

    x: [B, n_input] float32
    params: dict with w1 [n_input, H], b1 [1, H], w2 [H, H], b2 [1, H],
            w3 [H, n_output], b3 [1, n_output]  (x @ W + b layout).
            Weights may be f32 or bf16 (see prepare_params); biases f32.
    returns: [B, n_output] float32
    """
    B, n_input = x.shape
    n_output = params["w3"].shape[1]
    if tb is None:
        tb = _pick_tile(B)

    grid = (pl.cdiv(B, tb),)   # partial tail block: Pallas masks OOB writes;
                               # garbage tail rows cannot pollute valid rows
                               # (the MLP is row-independent).

    # Weights/biases: full-array blocks pinned to block 0 -> VMEM-resident
    # across all batch tiles (no re-DMA per iteration).
    resident = lambda a: pl.BlockSpec(a.shape, lambda i: (0,) * a.ndim)

    return pl.pallas_call(
        mlp_kernel,
        out_shape=jax.ShapeDtypeStruct((B, n_output), jnp.float32),
        grid=grid,
        in_specs=[
            pl.BlockSpec((tb, n_input), lambda i: (i, 0)),   # x streams over batch
            resident(params["w1"]), resident(params["b1"]),
            resident(params["w2"]), resident(params["b2"]),
            resident(params["w3"]), resident(params["b3"]),
        ],
        out_specs=pl.BlockSpec((tb, n_output), lambda i: (i, 0)),
        compiler_params=pltpu.CompilerParams(
            dimension_semantics=("parallel",)),
    )(x, params["w1"], params["b1"], params["w2"], params["b2"],
      params["w3"], params["b3"])


def init_params(key, n_input, n_output, n_hidden=128):
    """Deterministic init mimicking nn.Linear default (uniform ±1/sqrt(fan_in))."""
    keys = jax.random.split(key, 6)

    def linear(kw, kb, fan_in, fan_out):
        bound = 1.0 / math.sqrt(fan_in)
        w = jax.random.uniform(kw, (fan_in, fan_out), jnp.float32, -bound, bound)
        b = jax.random.uniform(kb, (1, fan_out), jnp.float32, -bound, bound)
        return w, b

    w1, b1 = linear(keys[0], keys[1], n_input, n_hidden)
    w2, b2 = linear(keys[2], keys[3], n_hidden, n_hidden)
    w3, b3 = linear(keys[4], keys[5], n_hidden, n_output)
    return {"w1": w1, "b1": b1, "w2": w2, "b2": b2, "w3": w3, "b3": b3}


def reference(x, p):
    h1 = _leaky_relu(x @ p["w1"] + p["b1"])
    h2 = _leaky_relu(h1 @ p["w2"] + p["b2"])
    return h2 @ p["w3"] + p["b3"]


if __name__ == "__main__":
    key = jax.random.PRNGKey(0)
    k_x, k_x2, k_p = jax.random.split(key, 3)

    B, n_input, n_hidden, n_output = 8, 32, 128, 8
    x = jax.random.normal(k_x, (B, n_input), jnp.float32)
    params = init_params(k_p, n_input, n_output, n_hidden)
    ref = reference(x, params)

    # f32-weights path: must match the reference tightly.
    params_f32 = prepare_params(params, matmul_dtype=jnp.float32)
    out_f32 = jax.block_until_ready(nonlinear_regressor(x, params_f32))
    assert out_f32.shape == (B, n_output)
    assert jnp.allclose(out_f32, ref, atol=1e-4, rtol=1e-4), "f32 mismatch vs reference"

    # Default bf16 matmul operands + f32 accumulation/elementwise.
    params_bf16 = prepare_params(params)  # bf16 weights
    out_bf16 = jax.block_until_ready(nonlinear_regressor(x, params_bf16))
    assert out_bf16.shape == (B, n_output)
    assert jnp.allclose(out_bf16, ref, atol=5e-2, rtol=5e-2), "bf16 mismatch vs reference"

    # Multi-tile + non-divisible tail block: verifies OOB-write masking of the
    # partial last batch tile (B2=200 -> tb=128, grid=2, tail=72 rows).
    B2 = 200
    x2 = jax.random.normal(k_x2, (B2, n_input), jnp.float32)
    ref2 = reference(x2, params)
    out2 = jax.block_until_ready(nonlinear_regressor(x2, params_f32))
    assert out2.shape == (B2, n_output)
    assert jnp.allclose(out2, ref2, atol=1e-4, rtol=1e-4), "tail-block mismatch vs reference"

    print("KERNEL_OK")
</pallas_src>

<mosaic_0001>
module attributes {stable_mosaic.version = 11 : i64} {
  func.func @mlp_kernel(%arg0: i32, %arg1: memref<128x32xf32, #tpu.memory_space<vmem>>, %arg2: memref<32x128xf32, #tpu.memory_space<vmem>>, %arg3: memref<1x128xf32, #tpu.memory_space<vmem>>, %arg4: memref<128x128xf32, #tpu.memory_space<vmem>>, %arg5: memref<1x128xf32, #tpu.memory_space<vmem>>, %arg6: memref<128x8xf32, #tpu.memory_space<vmem>>, %arg7: memref<1x8xf32, #tpu.memory_space<vmem>>, %arg8: memref<128x8xf32, #tpu.memory_space<vmem>>) attributes {dimension_semantics = [#tpu.dimension_semantics<parallel>], iteration_bounds = array<i64: 1>, scalar_prefetch = 0 : i64, scratch_operands = 0 : i64, tpu.core_type = #tpu.core_type<tc>, window_params = [{transform_indices = @transform_0, window_bounds = array<i64: 128, 32>}, {pipeline_mode = #tpu.pipeline_mode<synchronous>, transform_indices = @transform_1, window_bounds = array<i64: 32, 128>}, {pipeline_mode = #tpu.pipeline_mode<synchronous>, transform_indices = @transform_2, window_bounds = array<i64: 1, 128>}, {pipeline_mode = #tpu.pipeline_mode<synchronous>, transform_indices = @transform_3, window_bounds = array<i64: 128, 128>}, {pipeline_mode = #tpu.pipeline_mode<synchronous>, transform_indices = @transform_4, window_bounds = array<i64: 1, 128>}, {pipeline_mode = #tpu.pipeline_mode<synchronous>, transform_indices = @transform_5, window_bounds = array<i64: 128, 8>}, {pipeline_mode = #tpu.pipeline_mode<synchronous>, transform_indices = @transform_6, window_bounds = array<i64: 1, 8>}, {transform_indices = @transform_7, window_bounds = array<i64: 128, 8>}]} {
    %c0 = arith.constant 0 : index
    %c0_0 = arith.constant 0 : index
    %0 = vector.load %arg1[%c0, %c0_0] : memref<128x32xf32, #tpu.memory_space<vmem>>, vector<128x32xf32>
    %c0_1 = arith.constant 0 : index
    %c0_2 = arith.constant 0 : index
    %1 = vector.load %arg2[%c0_1, %c0_2] : memref<32x128xf32, #tpu.memory_space<vmem>>, vector<32x128xf32>
    %cst = arith.constant dense<0.000000e+00> : vector<128x128xf32>
    %2 = tpu.matmul %0, %1, %cst {dimension_numbers = #tpu.dot_dimension_numbers<[1], [0], [0], [1], [0, 0, 1, 1], [], []>} : vector<128x32xf32>, vector<32x128xf32>, vector<128x128xf32> -> vector<128x128xf32>
    %c0_3 = arith.constant 0 : index
    %c0_4 = arith.constant 0 : index
    %3 = vector.load %arg3[%c0_3, %c0_4] : memref<1x128xf32, #tpu.memory_space<vmem>>, vector<1x128xf32>
    %4 = vector.broadcast %3 : vector<1x128xf32> to vector<128x128xf32>
    %5 = arith.addf %2, %4 : vector<128x128xf32>
    %cst_5 = arith.constant 0.000000e+00 : f32
    %6 = vector.broadcast %cst_5 : f32 to vector<128x128xf32>
    %7 = arith.cmpf oge, %5, %6 : vector<128x128xf32>
    %cst_6 = arith.constant 1.000000e-01 : f32
    %8 = vector.broadcast %cst_6 : f32 to vector<128x128xf32>
    %9 = arith.mulf %8, %5 : vector<128x128xf32>
    %10 = arith.select %7, %5, %9 : vector<128x128xi1>, vector<128x128xf32>
    %c0_7 = arith.constant 0 : index
    %c0_8 = arith.constant 0 : index
    %11 = vector.load %arg4[%c0_7, %c0_8] : memref<128x128xf32, #tpu.memory_space<vmem>>, vector<128x128xf32>
    %cst_9 = arith.constant dense<0.000000e+00> : vector<128x128xf32>
    %12 = tpu.matmul %10, %11, %cst_9 {dimension_numbers = #tpu.dot_dimension_numbers<[1], [0], [0], [1], [0, 0, 1, 1], [], []>} : vector<128x128xf32>, vector<128x128xf32>, vector<128x128xf32> -> vector<128x128xf32>
    %c0_10 = arith.constant 0 : index
    %c0_11 = arith.constant 0 : index
    %13 = vector.load %arg5[%c0_10, %c0_11] : memref<1x128xf32, #tpu.memory_space<vmem>>, vector<1x128xf32>
    %14 = vector.broadcast %13 : vector<1x128xf32> to vector<128x128xf32>
    %15 = arith.addf %12, %14 : vector<128x128xf32>
    %cst_12 = arith.constant 0.000000e+00 : f32
    %16 = vector.broadcast %cst_12 : f32 to vector<128x128xf32>
    %17 = arith.cmpf oge, %15, %16 : vector<128x128xf32>
    %cst_13 = arith.constant 1.000000e-01 : f32
    %18 = vector.broadcast %cst_13 : f32 to vector<128x128xf32>
    %19 = arith.mulf %18, %15 : vector<128x128xf32>
    %20 = arith.select %17, %15, %19 : vector<128x128xi1>, vector<128x128xf32>
    %c0_14 = arith.constant 0 : index
    %c0_15 = arith.constant 0 : index
    %21 = vector.load %arg6[%c0_14, %c0_15] : memref<128x8xf32, #tpu.memory_space<vmem>>, vector<128x8xf32>
    %cst_16 = arith.constant dense<0.000000e+00> : vector<128x8xf32>
    %22 = tpu.matmul %20, %21, %cst_16 {dimension_numbers = #tpu.dot_dimension_numbers<[1], [0], [0], [1], [0, 0, 1, 1], [], []>} : vector<128x128xf32>, vector<128x8xf32>, vector<128x8xf32> -> vector<128x8xf32>
    %c0_17 = arith.constant 0 : index
    %c0_18 = arith.constant 0 : index
    %23 = vector.load %arg7[%c0_17, %c0_18] : memref<1x8xf32, #tpu.memory_space<vmem>>, vector<1x8xf32>
    %24 = vector.broadcast %23 : vector<1x8xf32> to vector<128x8xf32>
    %25 = arith.addf %22, %24 : vector<128x8xf32>
    %c0_19 = arith.constant 0 : index
    %c0_20 = arith.constant 0 : index
    %26 = vector.load %arg8[%c0_19, %c0_20] : memref<128x8xf32, #tpu.memory_space<vmem>>, vector<128x8xf32>
    tpu.vector_store %arg8[%c0_19, %c0_20], %25 {strides = array<i32>} : memref<128x8xf32, #tpu.memory_space<vmem>>, vector<128x8xf32>,
    return
  }
  func.func @transform_0(%arg0: i32) -> (i32, i32) {
    %c0_i32 = arith.constant 0 : i32
    %c0_i32_0 = arith.constant 0 : i32
    return %arg0, %c0_i32 : i32, i32
  }
  func.func @transform_1(%arg0: i32) -> (i32, i32) {
    %c0_i32 = arith.constant 0 : i32
    %c0_i32_0 = arith.constant 0 : i32
    %c0_i32_1 = arith.constant 0 : i32
    return %c0_i32, %c0_i32_0 : i32, i32
  }
  func.func @transform_2(%arg0: i32) -> (i32, i32) {
    %c0_i32 = arith.constant 0 : i32
    %c0_i32_0 = arith.constant 0 : i32
    %c0_i32_1 = arith.constant 0 : i32
    return %c0_i32, %c0_i32_0 : i32, i32
  }
  func.func @transform_3(%arg0: i32) -> (i32, i32) {
    %c0_i32 = arith.constant 0 : i32
    %c0_i32_0 = arith.constant 0 : i32
    %c0_i32_1 = arith.constant 0 : i32
    return %c0_i32, %c0_i32_0 : i32, i32
  }
  func.func @transform_4(%arg0: i32) -> (i32, i32) {
    %c0_i32 = arith.constant 0 : i32
    %c0_i32_0 = arith.constant 0 : i32
    %c0_i32_1 = arith.constant 0 : i32
    return %c0_i32, %c0_i32_0 : i32, i32
  }
  func.func @transform_5(%arg0: i32) -> (i32, i32) {
    %c0_i32 = arith.constant 0 : i32
    %c0_i32_0 = arith.constant 0 : i32
    %c0_i32_1 = arith.constant 0 : i32
    return %c0_i32, %c0_i32_0 : i32, i32
  }
  func.func @transform_6(%arg0: i32) -> (i32, i32) {
    %c0_i32 = arith.constant 0 : i32
    %c0_i32_0 = arith.constant 0 : i32
    %c0_i32_1 = arith.constant 0 : i32
    return %c0_i32, %c0_i32_0 : i32, i32
  }
  func.func @transform_7(%arg0: i32) -> (i32, i32) {
    %c0_i32 = arith.constant 0 : i32
    %c0_i32_0 = arith.constant 0 : i32
    return %arg0, %c0_i32 : i32, i32
  }
}

</mosaic_0001>

<llo_original>
// kernel: nonlinear_regressor.1
$region0: #{nonlinear_regressor.1}
  #allocation0 [shape = 'u32[]', space=smem, size = 0x4, offset = 0x4, fixed_abs, tag = 'smem constant byte address 0x4 - core index']
  #allocation1 [shape = 'u32[144,128]{1,0:T(1,128)}', space=vmem, size = 0x12000, scoped, tag = 'internal scratch']
  %s0 = inlined_call_operand.vmem [shape: f32[8,32], index: 0, kind: input, shape index: {}]
  %s1 = inlined_call_operand.hbm [shape: f32[32,128], index: 1, kind: input, shape index: {}]
  %s2 = inlined_call_operand.vmem [shape: f32[1,128], index: 2, kind: input, shape index: {}]
  %s3 = inlined_call_operand.vmem [shape: f32[128,128], index: 3, kind: input, shape index: {}]
  %s4 = inlined_call_operand.vmem [shape: f32[1,128], index: 4, kind: input, shape index: {}]
  %s5 = inlined_call_operand.vmem [shape: f32[128,8], index: 5, kind: input, shape index: {}]
  %s6 = inlined_call_operand.vmem [shape: f32[1,8], index: 6, kind: input, shape index: {}]
  %s7 = inlined_call_operand.hbm [shape: f32[8,8], index: 7, kind: output, shape index: {}]
  %s8 = sld [smem:[#allocation0]]
  $region42: #{nonlinear_regressor.1} parent=0
    _
  %s10 = ssub.s32 1, %s8
  %s11 = scalar_select 0, %s10, %s8
  $region1: #{nonlinear_regressor.1} parent=0
    #allocation2 [shape = 'u8[16384]{0}', space=vmem, size = 0x4000, scoped, tag = 'input window, operand 1, single buffered']
    #allocation3 [shape = 's32[1]{0}', space=sflag, size = 0x4, scoped, tag = 'scoped memory for nonlinear_regressor.1']
    #allocation4 [shape = 's32[1]{0}', space=sflag, size = 0x4, scoped, tag = 'scoped memory for nonlinear_regressor.1']
    #allocation5 [shape = 'u8[65536]{0}', space=vmem, size = 0x10000, scoped, tag = 'output window, operand 0, single buffered']
    %12 = vsyncpa [#allocation3], 0
    %13 = vsyncpa [#allocation4], 0
    // Predicated region
    $region2: #{nonlinear_regressor.1} parent=1 // pred_check
      _
    $region3: #{nonlinear_regressor.1} parent=1 // pred_check_branch
      %15 = sbr.rel (0) target = $region5
    $region4: #{nonlinear_regressor.1} parent=1 // pred_region
      _
    $region5: #{nonlinear_regressor.1} parent=1 // pred_fallthru
      _
    // Predicated region
    $region6: #{nonlinear_regressor.1} parent=1 // pred_check
      _
    $region7: #{nonlinear_regressor.1} parent=1 // pred_check_branch
      %17 = sbr.rel (0) target = $region9
    $region8: #{nonlinear_regressor.1} parent=1 // pred_region
      %s19 = ssub.s32 512, 512
      %20 = vsyncadd [#allocation3], %s19
      %s21 = sshll.u32 [#allocation2], 4
      %s22 = int_to_ptr.vmem [resolvable:$true] %s21
      %27 = dma.hbm_to_vmem [thread:$0]  %s1, 512, %s22, [#allocation3], 128, 128, 8
    $region9: #{nonlinear_regressor.1} parent=1 // pred_fallthru
      _
    // Predicated region
    $region10: #{nonlinear_regressor.1} parent=1 // pred_check
      _
    $region11: #{nonlinear_regressor.1} parent=1 // pred_check_branch
      %29 = sbr.rel (0) target = $region13
    $region12: #{nonlinear_regressor.1} parent=1 // pred_region
      _
    $region13: #{nonlinear_regressor.1} parent=1 // pred_fallthru
      _
    // Predicated region
    $region14: #{nonlinear_regressor.1} parent=1 // pred_check
      _
    $region15: #{nonlinear_regressor.1} parent=1 // pred_check_branch
      %31 = sbr.rel (0) target = $region17
    $region16: #{nonlinear_regressor.1} parent=1 // pred_region
      _
    $region17: #{nonlinear_regressor.1} parent=1 // pred_fallthru
      _
    // Predicated region
    $region18: #{nonlinear_regressor.1} parent=1 // pred_check
      _
    $region19: #{nonlinear_regressor.1} parent=1 // pred_check_branch
      %33 = sbr.rel (0) target = $region21
    $region20: #{nonlinear_regressor.1} parent=1 // pred_region
      _
    $region21: #{nonlinear_regressor.1} parent=1 // pred_fallthru
      _
    // Predicated region
    $region22: #{nonlinear_regressor.1} parent=1 // pred_check
      _
    $region23: #{nonlinear_regressor.1} parent=1 // pred_check_branch
      %35 = sbr.rel (0) target = $region25
    $region24: #{nonlinear_regressor.1} parent=1 // pred_region
      _
    $region25: #{nonlinear_regressor.1} parent=1 // pred_fallthru
      _
    // Predicated region
    $region26: #{nonlinear_regressor.1} parent=1 // pred_check
      _
    $region27: #{nonlinear_regressor.1} parent=1 // pred_check_branch
      %37 = sbr.rel (0) target = $region29
    $region28: #{nonlinear_regressor.1} parent=1 // pred_region
      _
    $region29: #{nonlinear_regressor.1} parent=1 // pred_fallthru
      _
    // Predicated region
    $region30: #{nonlinear_regressor.1} parent=1 // pred_check
      _
    $region31: #{nonlinear_regressor.1} parent=1 // pred_check_branch
      %39 = sbr.rel (0) target = $region33
    $region32: #{nonlinear_regressor.1} parent=1 // pred_region
      %40 = dma.done [#allocation3], 512
    $region33: #{nonlinear_regressor.1} parent=1 // pred_fallthru
      _
    %v41 = vld [vmem:[%s0] sm:$0xff]
    %v42 = vld [vmem:[%s0 + $0x8] sm:$0xff]
    %v43 = vld [vmem:[%s0 + $0x10] sm:$0xff]
    %v44 = vld [vmem:[%s0 + $0x18] sm:$0xff]
    %v45 = vld [vmem:[%s0 + $0x20] sm:$0xff]
    %v46 = vld [vmem:[%s0 + $0x28] sm:$0xff]
    %v47 = vld [vmem:[%s0 + $0x30] sm:$0xff]
    %v48 = vld [vmem:[%s0 + $0x38] sm:$0xff]
    %v49 = vld [vmem:[%s0 + $0x40] sm:$0xff]
    %v50 = vld [vmem:[%s0 + $0x48] sm:$0xff]
    %v51 = vld [vmem:[%s0 + $0x50] sm:$0xff]
    %v52 = vld [vmem:[%s0 + $0x58] sm:$0xff]
    %v53 = vld [vmem:[%s0 + $0x60] sm:$0xff]
    %v54 = vld [vmem:[%s0 + $0x68] sm:$0xff]
    %v55 = vld [vmem:[%s0 + $0x70] sm:$0xff]
    %v56 = vld [vmem:[%s0 + $0x78] sm:$0xff]
    %v57 = vld [vmem:[#allocation2] sm:$0xff]
    %v58 = vld [vmem:[#allocation2 + $0x8] sm:$0xff]
    %v59 = vld [vmem:[#allocation2 + $0x10] sm:$0xff]
    %v60 = vld [vmem:[#allocation2 + $0x18] sm:$0xff]
    %v61 = vld [vmem:[%s2] sm:$0x1]
    %v63 = vlaneseq
    %v64 = vshrl.u32 %v63, 7
    %v65 = vsub.s32 0, %v64
    %v66 = vrot.slane %v61, %v65
    %vm68 = vcmask 261120
    %v70 = vsel %vm68, %v41, 0
    %v73 = vsel %vm68, %v42, 0
    %v76 = vsel %vm68, %v43, 0
    %v79 = vsel %vm68, %v44, 0
    %v82 = vsel %vm68, %v45, 0
    %v85 = vsel %vm68, %v46, 0
    %v88 = vsel %vm68, %v47, 0
    %v91 = vsel %vm68, %v48, 0
    %v94 = vsel %vm68, %v49, 0
    %v97 = vsel %vm68, %v50, 0
    %v100 = vsel %vm68, %v51, 0
    %v103 = vsel %vm68, %v52, 0
    %v106 = vsel %vm68, %v53, 0
    %v109 = vsel %vm68, %v54, 0
    %v112 = vsel %vm68, %v55, 0
    %v115 = vsel %vm68, %v56, 0
    %117 = vmatprep.subr.mxu0 0.0
    %118 = vmatpush1.msra.mxu0 %v57
    %119 = vmatprep.subr.mxu0 0.0
    %120 = vmatpush1.msra.mxu0 %v58
    %121 = vmatprep.subr.mxu0 0.0
    %122 = vmatpush1.msra.mxu0 %v59
    %123 = vmatprep.subr.mxu0 0.0
    %124 = vmatpush1.msra.mxu0 %v60
    %125 = vmatprep.subr.mxu0 0.0
    %126 = vmatpush1.msra.mxu0 0.0
    %127 = vmatprep.subr.mxu0 0.0
    %128 = vmatpush1.msra.mxu0 0.0
    %129 = vmatprep.subr.mxu0 0.0
    %130 = vmatpush1.msra.mxu0 0.0
    %131 = vmatprep.subr.mxu0 0.0
    %132 = vmatpush1.msra.mxu0 0.0
    %133 = vmatprep.subr.mxu0 0.0
    %134 = vmatpush1.msra.mxu0 0.0
    %135 = vmatprep.subr.mxu0 0.0
    %136 = vmatpush1.msra.mxu0 0.0
    %137 = vmatprep.subr.mxu0 0.0
    %138 = vmatpush1.msra.mxu0 0.0
    %139 = vmatprep.subr.mxu0 0.0
    %140 = vmatpush1.msra.mxu0 0.0
    %141 = vmatprep.subr.mxu0 0.0
    %142 = vmatpush1.msra.mxu0 0.0
    %143 = vmatprep.subr.mxu0 0.0
    %144 = vmatpush1.msra.mxu0 0.0
    %145 = vmatprep.subr.mxu0 0.0
    %146 = vmatpush1.msra.mxu0 0.0
    %147 = vmatprep.subr.mxu0 0.0
    %148 = vmatpush1.msra.mxu0 0.0
    %149 = vmatprep.subr.mxu0 0.0
    %150 = vmatpush1.msra.mxu0 0.0
    %151 = vmatprep.subr.mxu0 0.0
    %152 = vmatpush1.msra.mxu0 0.0
    %153 = vmatprep.subr.mxu0 0.0
    %154 = vmatpush1.msra.mxu0 0.0
    %155 = vmatprep.subr.mxu0 0.0
    %156 = vmatpush1.msra.mxu0 0.0
    %157 = vmatprep.subr.mxu0 0.0
    %158 = vmatpush1.msra.mxu0 0.0
    %159 = vmatprep.subr.mxu0 0.0
    %160 = vmatpush1.msra.mxu0 0.0
    %161 = vmatprep.subr.mxu0 0.0
    %162 = vmatpush1.msra.mxu0 0.0
    %163 = vmatprep.subr.mxu0 0.0
    %164 = vmatpush1.msra.mxu0 0.0
    %165 = vmatprep.subr.mxu0 0.0
    %166 = vmatpush1.msra.mxu0 0.0
    %167 = vmatprep.subr.mxu0 0.0
    %168 = vmatpush1.msra.mxu0 0.0
    %169 = vmatprep.subr.mxu0 0.0
    %170 = vmatpush1.msra.mxu0 0.0
    %171 = vmatprep.subr.mxu0 0.0
    %172 = vmatpush1.msra.mxu0 0.0
    %173 = vmatprep.subr.mxu0 0.0
    %174 = vmatpush1.msra.mxu0 0.0
    %175 = vmatprep.subr.mxu0 0.0
    %176 = vmatpush1.msra.mxu0 0.0
    %177 = vmatprep.subr.mxu0 0.0
    %178 = vmatpush1.msra.mxu0 0.0
    %179 = vmatprep.subr.mxu0 0.0
    %180 = vmatpush1.msra.mxu0 0.0
    %181 = vmatprep.mubr.f32.mxu0 0.0
    %182 = vmatmul.mubr.f32.gmra.mrb[0].mxu0 %v70
    %v183 = vpop.f32.mrb[0].mxu0
    %v184 = vadd.f32 %v66, %v183
    %v185 = vpop.f32.mrb[0].mxu0
    %186 = vmatprep.mubr.f32.mxu0 0.0
    %187 = vmatmul.mubr.f32.gmra.mrb[0].mxu0 %v73
    %v188 = vpop.f32.mrb[0].mxu0
    %v189 = vadd.f32 %v66, %v188
    %v190 = vpop.f32.mrb[0].mxu0
    %191 = vmatprep.mubr.f32.mxu0 0.0
    %192 = vmatmul.mubr.f32.gmra.mrb[0].mxu0 %v76
    %v193 = vpop.f32.mrb[0].mxu0
    %v194 = vadd.f32 %v66, %v193
    %v195 = vpop.f32.mrb[0].mxu0
    %196 = vmatprep.mubr.f32.mxu0 0.0
    %197 = vmatmul.mubr.f32.gmra.mrb[0].mxu0 %v79
    %v198 = vpop.f32.mrb[0].mxu0
    %v199 = vadd.f32 %v66, %v198
    %v200 = vpop.f32.mrb[0].mxu0
    %201 = vmatprep.mubr.f32.mxu0 0.0
    %202 = vmatmul.mubr.f32.gmra.mrb[0].mxu0 %v82
    %v203 = vpop.f32.mrb[0].mxu0
    %v204 = vadd.f32 %v66, %v203
    %v205 = vpop.f32.mrb[0].mxu0
    %206 = vmatprep.mubr.f32.mxu0 0.0
    %207 = vmatmul.mubr.f32.gmra.mrb[0].mxu0 %v85
    %v208 = vpop.f32.mrb[0].mxu0
    %v209 = vadd.f32 %v66, %v208
    %v210 = vpop.f32.mrb[0].mxu0
    %211 = vmatprep.mubr.f32.mxu0 0.0
    %212 = vmatmul.mubr.f32.gmra.mrb[0].mxu0 %v88
    %v213 = vpop.f32.mrb[0].mxu0
    %v214 = vadd.f32 %v66, %v213
    %v215 = vpop.f32.mrb[0].mxu0
    %216 = vmatprep.mubr.f32.mxu0 0.0
    %217 = vmatmul.mubr.f32.gmra.mrb[0].mxu0 %v91
    %v218 = vpop.f32.mrb[0].mxu0
    %v219 = vadd.f32 %v66, %v218
    %v220 = vpop.f32.mrb[0].mxu0
    %221 = vmatprep.mubr.f32.mxu0 0.0
    %222 = vmatmul.mubr.f32.gmra.mrb[0].mxu0 %v94
    %v223 = vpop.f32.mrb[0].mxu0
    %v224 = vadd.f32 %v66, %v223
    %v225 = vpop.f32.mrb[0].mxu0
    %226 = vmatprep.mubr.f32.mxu0 0.0
    %227 = vmatmul.mubr.f32.gmra.mrb[0].mxu0 %v97
    %v228 = vpop.f32.mrb[0].mxu0
    %v229 = vadd.f32 %v66, %v228
    %v230 = vpop.f32.mrb[0].mxu0
    %231 = vmatprep.mubr.f32.mxu0 0.0
    %232 = vmatmul.mubr.f32.gmra.mrb[0].mxu0 %v100
    %v233 = vpop.f32.mrb[0].mxu0
    %v234 = vadd.f32 %v66, %v233
    %v235 = vpop.f32.mrb[0].mxu0
    %236 = vmatprep.mubr.f32.mxu0 0.0
    %237 = vmatmul.mubr.f32.gmra.mrb[0].mxu0 %v103
    %v238 = vpop.f32.mrb[0].mxu0
    %v239 = vadd.f32 %v66, %v238
    %v240 = vpop.f32.mrb[0].mxu0
    %241 = vmatprep.mubr.f32.mxu0 0.0
    %242 = vmatmul.mubr.f32.gmra.mrb[0].mxu0 %v106
    %v243 = vpop.f32.mrb[0].mxu0
    %v244 = vadd.f32 %v66, %v243
    %v245 = vpop.f32.mrb[0].mxu0
    %246 = vmatprep.mubr.f32.mxu0 0.0
    %247 = vmatmul.mubr.f32.gmra.mrb[0].mxu0 %v109
    %v248 = vpop.f32.mrb[0].mxu0
    %v249 = vadd.f32 %v66, %v248
    %v250 = vpop.f32.mrb[0].mxu0
    %251 = vmatprep.mubr.f32.mxu0 0.0
    %252 = vmatmul.mubr.f32.gmra.mrb[0].mxu0 %v112
    %v253 = vpop.f32.mrb[0].mxu0
    %v254 = vadd.f32 %v66, %v253
    %v255 = vpop.f32.mrb[0].mxu0
    %256 = vmatprep.mubr.f32.mxu0 0.0
    %257 = vmatmul.mubr.f32.gmra.mrb[0].mxu0 %v115
    %v258 = vpop.f32.mrb[0].mxu0
    %v259 = vadd.f32 %v66, %v258
    %v260 = vpop.f32.mrb[0].mxu0
    %261 = vdwg.mxu0
    %vm262 = vcmp.ge.f32.partialorder %v184, 0.0
    %vm263 = vcmp.ge.f32.partialorder %v189, 0.0
    %vm264 = vcmp.ge.f32.partialorder %v194, 0.0
    %vm265 = vcmp.ge.f32.partialorder %v199, 0.0
    %vm266 = vcmp.ge.f32.partialorder %v204, 0.0
    %vm267 = vcmp.ge.f32.partialorder %v209, 0.0
    %vm268 = vcmp.ge.f32.partialorder %v214, 0.0
    %vm269 = vcmp.ge.f32.partialorder %v219, 0.0
    %vm270 = vcmp.ge.f32.partialorder %v224, 0.0
    %vm271 = vcmp.ge.f32.partialorder %v229, 0.0
    %vm272 = vcmp.ge.f32.partialorder %v234, 0.0
    %vm273 = vcmp.ge.f32.partialorder %v239, 0.0
    %vm274 = vcmp.ge.f32.partialorder %v244, 0.0
    %vm275 = vcmp.ge.f32.partialorder %v249, 0.0
    %vm276 = vcmp.ge.f32.partialorder %v254, 0.0
    %vm277 = vcmp.ge.f32.partialorder %v259, 0.0
    %v278 = vmul.f32 %v184, 0.1
    %v279 = vmul.f32 %v189, 0.1
    %v280 = vmul.f32 %v194, 0.1
    %v281 = vmul.f32 %v199, 0.1
    %v282 = vmul.f32 %v204, 0.1
    %v283 = vmul.f32 %v209, 0.1
    %v284 = vmul.f32 %v214, 0.1
    %v285 = vmul.f32 %v219, 0.1
    %v286 = vmul.f32 %v224, 0.1
    %v287 = vmul.f32 %v229, 0.1
    %v288 = vmul.f32 %v234, 0.1
    %v289 = vmul.f32 %v239, 0.1
    %v290 = vmul.f32 %v244, 0.1
    %v291 = vmul.f32 %v249, 0.1
    %v292 = vmul.f32 %v254, 0.1
    %v293 = vmul.f32 %v259, 0.1
    %v294 = vsel %vm262, %v184, %v278
    %v295 = vsel %vm263, %v189, %v279
    %v296 = vsel %vm264, %v194, %v280
    %v297 = vsel %vm265, %v199, %v281
    %v298 = vsel %vm266, %v204, %v282
    %v299 = vsel %vm267, %v209, %v283
    %v300 = vsel %vm268, %v214, %v284
    %v301 = vsel %vm269, %v219, %v285
    %v302 = vsel %vm270, %v224, %v286
    %v303 = vsel %vm271, %v229, %v287
    %v304 = vsel %vm272, %v234, %v288
    %v305 = vsel %vm273, %v239, %v289
    %v306 = vsel %vm274, %v244, %v290
    %v307 = vsel %vm275, %v249, %v291
    %v308 = vsel %vm276, %v254, %v292
    %v309 = vsel %vm277, %v259, %v293
    %v310 = vld [vmem:[%s3] sm:$0xff]
    %v311 = vld [vmem:[%s3 + $0x8] sm:$0xff]
    %v312 = vld [vmem:[%s3 + $0x10] sm:$0xff]
    %v313 = vld [vmem:[%s3 + $0x18] sm:$0xff]
    %v314 = vld [vmem:[%s3 + $0x20] sm:$0xff]
    %v315 = vld [vmem:[%s3 + $0x28] sm:$0xff]
    %v316 = vld [vmem:[%s3 + $0x30] sm:$0xff]
    %v317 = vld [vmem:[%s3 + $0x38] sm:$0xff]
    %v318 = vld [vmem:[%s3 + $0x40] sm:$0xff]
    %v319 = vld [vmem:[%s3 + $0x48] sm:$0xff]
    %v320 = vld [vmem:[%s3 + $0x50] sm:$0xff]
    %v321 = vld [vmem:[%s3 + $0x58] sm:$0xff]
    %v322 = vld [vmem:[%s3 + $0x60] sm:$0xff]
    %v323 = vld [vmem:[%s3 + $0x68] sm:$0xff]
    %v324 = vld [vmem:[%s3 + $0x70] sm:$0xff]
    %v325 = vld [vmem:[%s3 + $0x78] sm:$0xff]
    %v326 = vld [vmem:[%s4] sm:$0x1]
    %v328 = vlaneseq
    %v329 = vshrl.u32 %v328, 7
    %v330 = vsub.s32 0, %v329
    %v331 = vrot.slane %v326, %v330
    %333 = vmatprep.subr.mxu0 0.0
    %334 = vmatpush1.msra.mxu0 %v310
    %335 = vmatprep.subr.mxu0 0.0
    %336 = vmatpush1.msra.mxu0 %v311
    %337 = vmatprep.subr.mxu0 0.0
    %338 = vmatpush1.msra.mxu0 %v312
    %339 = vmatprep.subr.mxu0 0.0
    %340 = vmatpush1.msra.mxu0 %v313
    %341 = vmatprep.subr.mxu0 0.0
    %342 = vmatpush1.msra.mxu0 %v314
    %343 = vmatprep.subr.mxu0 0.0
    %344 = vmatpush1.msra.mxu0 %v315
    %345 = vmatprep.subr.mxu0 0.0
    %346 = vmatpush1.msra.mxu0 %v316
    %347 = vmatprep.subr.mxu0 0.0
    %348 = vmatpush1.msra.mxu0 %v317
    %349 = vmatprep.subr.mxu0 0.0
    %350 = vmatpush1.msra.mxu0 %v318
    %351 = vmatprep.subr.mxu0 0.0
    %352 = vmatpush1.msra.mxu0 %v319
    %353 = vmatprep.subr.mxu0 0.0
    %354 = vmatpush1.msra.mxu0 %v320
    %355 = vmatprep.subr.mxu0 0.0
    %356 = vmatpush1.msra.mxu0 %v321
    %357 = vmatprep.subr.mxu0 0.0
    %358 = vmatpush1.msra.mxu0 %v322
    %359 = vmatprep.subr.mxu0 0.0
    %360 = vmatpush1.msra.mxu0 %v323
    %361 = vmatprep.subr.mxu0 0.0
    %362 = vmatpush1.msra.mxu0 %v324
    %363 = vmatprep.subr.mxu0 0.0
    %364 = vmatpush1.msra.mxu0 %v325
    %365 = vmatprep.subr.mxu0 0.0
    %366 = vmatpush1.msra.mxu0 0.0
    %367 = vmatprep.subr.mxu0 0.0
    %368 = vmatpush1.msra.mxu0 0.0
    %369 = vmatprep.subr.mxu0 0.0
    %370 = vmatpush1.msra.mxu0 0.0
    %371 = vmatprep.subr.mxu0 0.0
    %372 = vmatpush1.msra.mxu0 0.0
    %373 = vmatprep.subr.mxu0 0.0
    %374 = vmatpush1.msra.mxu0 0.0
    %375 = vmatprep.subr.mxu0 0.0
    %376 = vmatpush1.msra.mxu0 0.0
    %377 = vmatprep.subr.mxu0 0.0
    %378 = vmatpush1.msra.mxu0 0.0
    %379 = vmatprep.subr.mxu0 0.0
    %380 = vmatpush1.msra.mxu0 0.0
    %381 = vmatprep.subr.mxu0 0.0
    %382 = vmatpush1.msra.mxu0 0.0
    %383 = vmatprep.subr.mxu0 0.0
    %384 = vmatpush1.msra.mxu0 0.0
    %385 = vmatprep.subr.mxu0 0.0
    %386 = vmatpush1.msra.mxu0 0.0
    %387 = vmatprep.subr.mxu0 0.0
    %388 = vmatpush1.msra.mxu0 0.0
    %389 = vmatprep.subr.mxu0 0.0
    %390 = vmatpush1.msra.mxu0 0.0
    %391 = vmatprep.subr.mxu0 0.0
    %392 = vmatpush1.msra.mxu0 0.0
    %393 = vmatprep.subr.mxu0 0.0
    %394 = vmatpush1.msra.mxu0 0.0
    %395 = vmatprep.subr.mxu0 0.0
    %396 = vmatpush1.msra.mxu0 0.0
    %397 = vmatprep.mubr.f32.mxu0 0.0
    %398 = vmatmul.mubr.f32.gmra.mrb[0].mxu0 %v294
    %v399 = vpop.f32.mrb[0].mxu0
    %v400 = vadd.f32 %v331, %v399
    %v401 = vpop.f32.mrb[0].mxu0
    %402 = vmatprep.mubr.f32.mxu0 0.0
    %403 = vmatmul.mubr.f32.gmra.mrb[0].mxu0 %v295
    %v404 = vpop.f32.mrb[0].mxu0
    %v405 = vadd.f32 %v331, %v404
    %v406 = vpop.f32.mrb[0].mxu0
    %407 = vmatprep.mubr.f32.mxu0 0.0
    %408 = vmatmul.mubr.f32.gmra.mrb[0].mxu0 %v296
    %v409 = vpop.f32.mrb[0].mxu0
    %v410 = vadd.f32 %v331, %v409
    %v411 = vpop.f32.mrb[0].mxu0
    %412 = vmatprep.mubr.f32.mxu0 0.0
    %413 = vmatmul.mubr.f32.gmra.mrb[0].mxu0 %v297
    %v414 = vpop.f32.mrb[0].mxu0
    %v415 = vadd.f32 %v331, %v414
    %v416 = vpop.f32.mrb[0].mxu0
    %417 = vmatprep.mubr.f32.mxu0 0.0
    %418 = vmatmul.mubr.f32.gmra.mrb[0].mxu0 %v298
    %v419 = vpop.f32.mrb[0].mxu0
    %v420 = vadd.f32 %v331, %v419
    %v421 = vpop.f32.mrb[0].mxu0
    %422 = vmatprep.mubr.f32.mxu0 0.0
    %423 = vmatmul.mubr.f32.gmra.mrb[0].mxu0 %v299
    %v424 = vpop.f32.mrb[0].mxu0
    %v425 = vadd.f32 %v331, %v424
    %v426 = vpop.f32.mrb[0].mxu0
    %427 = vmatprep.mubr.f32.mxu0 0.0
    %428 = vmatmul.mubr.f32.gmra.mrb[0].mxu0 %v300
    %v429 = vpop.f32.mrb[0].mxu0
    %v430 = vadd.f32 %v331, %v429
    %v431 = vpop.f32.mrb[0].mxu0
    %432 = vmatprep.mubr.f32.mxu0 0.0
    %433 = vmatmul.mubr.f32.gmra.mrb[0].mxu0 %v301
    %v434 = vpop.f32.mrb[0].mxu0
    %v435 = vadd.f32 %v331, %v434
    %v436 = vpop.f32.mrb[0].mxu0
    %437 = vmatprep.mubr.f32.mxu0 0.0
    %438 = vmatmul.mubr.f32.gmra.mrb[0].mxu0 %v302
    %v439 = vpop.f32.mrb[0].mxu0
    %v440 = vadd.f32 %v331, %v439
    %v441 = vpop.f32.mrb[0].mxu0
    %442 = vmatprep.mubr.f32.mxu0 0.0
    %443 = vmatmul.mubr.f32.gmra.mrb[0].mxu0 %v303
    %v444 = vpop.f32.mrb[0].mxu0
    %v445 = vadd.f32 %v331, %v444
    %v446 = vpop.f32.mrb[0].mxu0
    %447 = vmatprep.mubr.f32.mxu0 0.0
    %448 = vmatmul.mubr.f32.gmra.mrb[0].mxu0 %v304
    %v449 = vpop.f32.mrb[0].mxu0
    %v450 = vadd.f32 %v331, %v449
    %v451 = vpop.f32.mrb[0].mxu0
    %452 = vmatprep.mubr.f32.mxu0 0.0
    %453 = vmatmul.mubr.f32.gmra.mrb[0].mxu0 %v305
    %v454 = vpop.f32.mrb[0].mxu0
    %v455 = vadd.f32 %v331, %v454
    %v456 = vpop.f32.mrb[0].mxu0
    %457 = vmatprep.mubr.f32.mxu0 0.0
    %458 = vmatmul.mubr.f32.gmra.mrb[0].mxu0 %v306
    %v459 = vpop.f32.mrb[0].mxu0
    %v460 = vadd.f32 %v331, %v459
    %v461 = vpop.f32.mrb[0].mxu0
    %462 = vmatprep.mubr.f32.mxu0 0.0
    %463 = vmatmul.mubr.f32.gmra.mrb[0].mxu0 %v307
    %v464 = vpop.f32.mrb[0].mxu0
    %v465 = vadd.f32 %v331, %v464
    %v466 = vpop.f32.mrb[0].mxu0
    %467 = vmatprep.mubr.f32.mxu0 0.0
    %468 = vmatmul.mubr.f32.gmra.mrb[0].mxu0 %v308
    %v469 = vpop.f32.mrb[0].mxu0
    %v470 = vadd.f32 %v331, %v469
    %v471 = vpop.f32.mrb[0].mxu0
    %472 = vmatprep.mubr.f32.mxu0 0.0
    %473 = vmatmul.mubr.f32.gmra.mrb[0].mxu0 %v309
    %v474 = vpop.f32.mrb[0].mxu0
    %v475 = vadd.f32 %v331, %v474
    %v476 = vpop.f32.mrb[0].mxu0
    %477 = vdwg.mxu0
    %vm478 = vcmp.ge.f32.partialorder %v400, 0.0
    %vm479 = vcmp.ge.f32.partialorder %v405, 0.0
    %vm480 = vcmp.ge.f32.partialorder %v410, 0.0
    %vm481 = vcmp.ge.f32.partialorder %v415, 0.0
    %vm482 = vcmp.ge.f32.partialorder %v420, 0.0
    %vm483 = vcmp.ge.f32.partialorder %v425, 0.0
    %vm484 = vcmp.ge.f32.partialorder %v430, 0.0
    %vm485 = vcmp.ge.f32.partialorder %v435, 0.0
    %vm486 = vcmp.ge.f32.partialorder %v440, 0.0
    %vm487 = vcmp.ge.f32.partialorder %v445, 0.0
    %vm488 = vcmp.ge.f32.partialorder %v450, 0.0
    %vm489 = vcmp.ge.f32.partialorder %v455, 0.0
    %vm490 = vcmp.ge.f32.partialorder %v460, 0.0
    %vm491 = vcmp.ge.f32.partialorder %v465, 0.0
    %vm492 = vcmp.ge.f32.partialorder %v470, 0.0
    %vm493 = vcmp.ge.f32.partialorder %v475, 0.0
    %v494 = vmul.f32 %v400, 0.1
    %v495 = vmul.f32 %v405, 0.1
    %v496 = vmul.f32 %v410, 0.1
    %v497 = vmul.f32 %v415, 0.1
    %v498 = vmul.f32 %v420, 0.1
    %v499 = vmul.f32 %v425, 0.1
    %v500 = vmul.f32 %v430, 0.1
    %v501 = vmul.f32 %v435, 0.1
    %v502 = vmul.f32 %v440, 0.1
    %v503 = vmul.f32 %v445, 0.1
    %v504 = vmul.f32 %v450, 0.1
    %v505 = vmul.f32 %v455, 0.1
    %v506 = vmul.f32 %v460, 0.1
    %v507 = vmul.f32 %v465, 0.1
    %v508 = vmul.f32 %v470, 0.1
    %v509 = vmul.f32 %v475, 0.1
    %v510 = vsel %vm478, %v400, %v494
    %v511 = vsel %vm479, %v405, %v495
    %v512 = vsel %vm480, %v410, %v496
    %v513 = vsel %vm481, %v415, %v497
    %v514 = vsel %vm482, %v420, %v498
    %v515 = vsel %vm483, %v425, %v499
    %v516 = vsel %vm484, %v430, %v500
    %v517 = vsel %vm485, %v435, %v501
    %v518 = vsel %vm486, %v440, %v502
    %v519 = vsel %vm487, %v445, %v503
    %v520 = vsel %vm488, %v450, %v504
    %v521 = vsel %vm489, %v455, %v505
    %v522 = vsel %vm490, %v460, %v506
    %v523 = vsel %vm491, %v465, %v507
    %v524 = vsel %vm492, %v470, %v508
    %v525 = vsel %vm493, %v475, %v509
    %v526 = vld [vmem:[%s5] sm:$0xff]
    %v527 = vld [vmem:[%s5 + $0x8] sm:$0xff]
    %v528 = vld [vmem:[%s5 + $0x10] sm:$0xff]
    %v529 = vld [vmem:[%s5 + $0x18] sm:$0xff]
    %v530 = vld [vmem:[%s5 + $0x20] sm:$0xff]
    %v531 = vld [vmem:[%s5 + $0x28] sm:$0xff]
    %v532 = vld [vmem:[%s5 + $0x30] sm:$0xff]
    %v533 = vld [vmem:[%s5 + $0x38] sm:$0xff]
    %v534 = vld [vmem:[%s5 + $0x40] sm:$0xff]
    %v535 = vld [vmem:[%s5 + $0x48] sm:$0xff]
    %v536 = vld [vmem:[%s5 + $0x50] sm:$0xff]
    %v537 = vld [vmem:[%s5 + $0x58] sm:$0xff]
    %v538 = vld [vmem:[%s5 + $0x60] sm:$0xff]
    %v539 = vld [vmem:[%s5 + $0x68] sm:$0xff]
    %v540 = vld [vmem:[%s5 + $0x70] sm:$0xff]
    %v541 = vld [vmem:[%s5 + $0x78] sm:$0xff]
    %v542 = vld [vmem:[%s6] sm:$0x1]
    %v544 = vlaneseq
    %v545 = vshrl.u32 %v544, 7
    %v546 = vsub.s32 0, %v545
    %v547 = vrot.slane %v542, %v546
    %549 = vmatprep.subr.mxu0 0.0
    %550 = vmatpush1.msra.mxu0 %v526
    %551 = vmatprep.subr.mxu0 0.0
    %552 = vmatpush1.msra.mxu0 %v527
    %553 = vmatprep.subr.mxu0 0.0
    %554 = vmatpush1.msra.mxu0 %v528
    %555 = vmatprep.subr.mxu0 0.0
    %556 = vmatpush1.msra.mxu0 %v529
    %557 = vmatprep.subr.mxu0 0.0
    %558 = vmatpush1.msra.mxu0 %v530
    %559 = vmatprep.subr.mxu0 0.0
    %560 = vmatpush1.msra.mxu0 %v531
    %561 = vmatprep.subr.mxu0 0.0
    %562 = vmatpush1.msra.mxu0 %v532
    %563 = vmatprep.subr.mxu0 0.0
    %564 = vmatpush1.msra.mxu0 %v533
    %565 = vmatprep.subr.mxu0 0.0
    %566 = vmatpush1.msra.mxu0 %v534
    %567 = vmatprep.subr.mxu0 0.0
    %568 = vmatpush1.msra.mxu0 %v535
    %569 = vmatprep.subr.mxu0 0.0
    %570 = vmatpush1.msra.mxu0 %v536
    %571 = vmatprep.subr.mxu0 0.0
    %572 = vmatpush1.msra.mxu0 %v537
    %573 = vmatprep.subr.mxu0 0.0
    %574 = vmatpush1.msra.mxu0 %v538
    %575 = vmatprep.subr.mxu0 0.0
    %576 = vmatpush1.msra.mxu0 %v539
    %577 = vmatprep.subr.mxu0 0.0
    %578 = vmatpush1.msra.mxu0 %v540
    %579 = vmatprep.subr.mxu0 0.0
    %580 = vmatpush1.msra.mxu0 %v541
    %581 = vmatprep.subr.mxu0 0.0
    %582 = vmatpush1.msra.mxu0 0.0
    %583 = vmatprep.subr.mxu0 0.0
    %584 = vmatpush1.msra.mxu0 0.0
    %585 = vmatprep.subr.mxu0 0.0
    %586 = vmatpush1.msra.mxu0 0.0
    %587 = vmatprep.subr.mxu0 0.0
    %588 = vmatpush1.msra.mxu0 0.0
    %589 = vmatprep.subr.mxu0 0.0
    %590 = vmatpush1.msra.mxu0 0.0
    %591 = vmatprep.subr.mxu0 0.0
    %592 = vmatpush1.msra.mxu0 0.0
    %593 = vmatprep.subr.mxu0 0.0
    %594 = vmatpush1.msra.mxu0 0.0
    %595 = vmatprep.subr.mxu0 0.0
    %596 = vmatpush1.msra.mxu0 0.0
    %597 = vmatprep.subr.mxu0 0.0
    %598 = vmatpush1.msra.mxu0 0.0
    %599 = vmatprep.subr.mxu0 0.0
    %600 = vmatpush1.msra.mxu0 0.0
    %601 = vmatprep.subr.mxu0 0.0
    %602 = vmatpush1.msra.mxu0 0.0
    %603 = vmatprep.subr.mxu0 0.0
    %604 = vmatpush1.msra.mxu0 0.0
    %605 = vmatprep.subr.mxu0 0.0
    %606 = vmatpush1.msra.mxu0 0.0
    %607 = vmatprep.subr.mxu0 0.0
    %608 = vmatpush1.msra.mxu0 0.0
    %609 = vmatprep.subr.mxu0 0.0
    %610 = vmatpush1.msra.mxu0 0.0
    %611 = vmatprep.subr.mxu0 0.0
    %612 = vmatpush1.msra.mxu0 0.0
    %613 = vmatprep.mubr.f32.mxu0 0.0
    %614 = vmatmul.mubr.f32.gmra.mrb[0].mxu0 %v510
    %v615 = vpop.f32.mrb[0].mxu0
    %v616 = vadd.f32 %v547, %v615
    %v617 = vpop.f32.mrb[0].mxu0
    %618 = vmatprep.mubr.f32.mxu0 0.0
    %619 = vmatmul.mubr.f32.gmra.mrb[0].mxu0 %v511
    %v620 = vpop.f32.mrb[0].mxu0
    %v621 = vadd.f32 %v547, %v620
    %v622 = vpop.f32.mrb[0].mxu0
    %623 = vmatprep.mubr.f32.mxu0 0.0
    %624 = vmatmul.mubr.f32.gmra.mrb[0].mxu0 %v512
    %v625 = vpop.f32.mrb[0].mxu0
    %v626 = vadd.f32 %v547, %v625
    %v627 = vpop.f32.mrb[0].mxu0
    %628 = vmatprep.mubr.f32.mxu0 0.0
    %629 = vmatmul.mubr.f32.gmra.mrb[0].mxu0 %v513
    %v630 = vpop.f32.mrb[0].mxu0
    %v631 = vadd.f32 %v547, %v630
    %v632 = vpop.f32.mrb[0].mxu0
    %633 = vmatprep.mubr.f32.mxu0 0.0
    %634 = vmatmul.mubr.f32.gmra.mrb[0].mxu0 %v514
    %v635 = vpop.f32.mrb[0].mxu0
    %v636 = vadd.f32 %v547, %v635
    %v637 = vpop.f32.mrb[0].mxu0
    %638 = vmatprep.mubr.f32.mxu0 0.0
    %639 = vmatmul.mubr.f32.gmra.mrb[0].mxu0 %v515
    %v640 = vpop.f32.mrb[0].mxu0
    %v641 = vadd.f32 %v547, %v640
    %v642 = vpop.f32.mrb[0].mxu0
    %643 = vmatprep.mubr.f32.mxu0 0.0
    %644 = vmatmul.mubr.f32.gmra.mrb[0].mxu0 %v516
    %v645 = vpop.f32.mrb[0].mxu0
    %v646 = vadd.f32 %v547, %v645
    %v647 = vpop.f32.mrb[0].mxu0
    %648 = vmatprep.mubr.f32.mxu0 0.0
    %649 = vmatmul.mubr.f32.gmra.mrb[0].mxu0 %v517
    %v650 = vpop.f32.mrb[0].mxu0
    %v651 = vadd.f32 %v547, %v650
    %v652 = vpop.f32.mrb[0].mxu0
    %653 = vmatprep.mubr.f32.mxu0 0.0
    %654 = vmatmul.mubr.f32.gmra.mrb[0].mxu0 %v518
    %v655 = vpop.f32.mrb[0].mxu0
    %v656 = vadd.f32 %v547, %v655
    %v657 = vpop.f32.mrb[0].mxu0
    %658 = vmatprep.mubr.f32.mxu0 0.0
    %659 = vmatmul.mubr.f32.gmra.mrb[0].mxu0 %v519
    %v660 = vpop.f32.mrb[0].mxu0
    %v661 = vadd.f32 %v547, %v660
    %v662 = vpop.f32.mrb[0].mxu0
    %663 = vmatprep.mubr.f32.mxu0 0.0
    %664 = vmatmul.mubr.f32.gmra.mrb[0].mxu0 %v520
    %v665 = vpop.f32.mrb[0].mxu0
    %v666 = vadd.f32 %v547, %v665
    %v667 = vpop.f32.mrb[0].mxu0
    %668 = vmatprep.mubr.f32.mxu0 0.0
    %669 = vmatmul.mubr.f32.gmra.mrb[0].mxu0 %v521
    %v670 = vpop.f32.mrb[0].mxu0
    %v671 = vadd.f32 %v547, %v670
    %v672 = vpop.f32.mrb[0].mxu0
    %673 = vmatprep.mubr.f32.mxu0 0.0
    %674 = vmatmul.mubr.f32.gmra.mrb[0].mxu0 %v522
    %v675 = vpop.f32.mrb[0].mxu0
    %v676 = vadd.f32 %v547, %v675
    %v677 = vpop.f32.mrb[0].mxu0
    %678 = vmatprep.mubr.f32.mxu0 0.0
    %679 = vmatmul.mubr.f32.gmra.mrb[0].mxu0 %v523
    %v680 = vpop.f32.mrb[0].mxu0
    %v681 = vadd.f32 %v547, %v680
    %v682 = vpop.f32.mrb[0].mxu0
    %683 = vmatprep.mubr.f32.mxu0 0.0
    %684 = vmatmul.mubr.f32.gmra.mrb[0].mxu0 %v524
    %v685 = vpop.f32.mrb[0].mxu0
    %v686 = vadd.f32 %v547, %v685
    %v687 = vpop.f32.mrb[0].mxu0
    %688 = vmatprep.mubr.f32.mxu0 0.0
    %689 = vmatmul.mubr.f32.gmra.mrb[0].mxu0 %v525
    %v690 = vpop.f32.mrb[0].mxu0
    %v691 = vadd.f32 %v547, %v690
    %v692 = vpop.f32.mrb[0].mxu0
    %693 = vdwg.mxu0
    %vm694 = vcmask 64512
    %695 = vst.msk [vmem:[#allocation5] sm:$0xff] %vm694, %v616
    %696 = vst.msk [vmem:[#allocation5 + $0x8] sm:$0xff] %vm694, %v621
    %697 = vst.msk [vmem:[#allocation5 + $0x10] sm:$0xff] %vm694, %v626
    %698 = vst.msk [vmem:[#allocation5 + $0x18] sm:$0xff] %vm694, %v631
    %699 = vst.msk [vmem:[#allocation5 + $0x20] sm:$0xff] %vm694, %v636
    %700 = vst.msk [vmem:[#allocation5 + $0x28] sm:$0xff] %vm694, %v641
    %701 = vst.msk [vmem:[#allocation5 + $0x30] sm:$0xff] %vm694, %v646
    %702 = vst.msk [vmem:[#allocation5 + $0x38] sm:$0xff] %vm694, %v651
    %703 = vst.msk [vmem:[#allocation5 + $0x40] sm:$0xff] %vm694, %v656
    %704 = vst.msk [vmem:[#allocation5 + $0x48] sm:$0xff] %vm694, %v661
    %705 = vst.msk [vmem:[#allocation5 + $0x50] sm:$0xff] %vm694, %v666
    %706 = vst.msk [vmem:[#allocation5 + $0x58] sm:$0xff] %vm694, %v671
    %707 = vst.msk [vmem:[#allocation5 + $0x60] sm:$0xff] %vm694, %v676
    %708 = vst.msk [vmem:[#allocation5 + $0x68] sm:$0xff] %vm694, %v681
    %709 = vst.msk [vmem:[#allocation5 + $0x70] sm:$0xff] %vm694, %v686
    %710 = vst.msk [vmem:[#allocation5 + $0x78] sm:$0xff] %vm694, %v691
    // Predicated region
    $region34: #{nonlinear_regressor.1} parent=1 // pred_check
      _
    $region35: #{nonlinear_regressor.1} parent=1 // pred_check_branch
      %712 = sbr.rel (0) target = $region37
    $region36: #{nonlinear_regressor.1} parent=1 // pred_region
      %s714 = ssub.s32 2048, 128
      %715 = vsyncadd [#allocation4], %s714
      %s716 = sshll.u32 [#allocation5], 4
      %s717 = int_to_ptr.vmem [resolvable:$true] %s716
      %722 = dma.vmem_to_hbm [thread:$0]  %s717, 128, %s7, [#allocation4], 128, 128, 8
    $region37: #{nonlinear_regressor.1} parent=1 // pred_fallthru
      _
    // Predicated region
    $region38: #{nonlinear_regressor.1} parent=1 // pred_check
      _
    $region39: #{nonlinear_regressor.1} parent=1 // pred_check_branch
      %724 = sbr.rel (0) target = $region41
    $region40: #{nonlinear_regressor.1} parent=1 // pred_region
      %725 = dma.done [#allocation4], 2048
    $region41: #{nonlinear_regressor.1} parent=1 // pred_fallthru
      _
    %726 = vsyncpa [#allocation3], 1
    %727 = vsyncpa [#allocation4], 1

</llo_original>
